<compile_context>
chip_gen: v7x
topology: tpu7x:2x2x1
jax: 0.10.0
libtpu: 0.0.40
codegen_flags: <defaults>
</compile_context>

<pallas_src>
import jax
import jax.numpy as jnp
from jax.experimental import pallas as pl
from jax.experimental.pallas import tpu as pltpu

_DEFAULT_TILE_B = 512  # mem-bound copy kernels plateau around 512-row f32 tiles


def _concat3_kernel(input_dim: int, latent_dim: int):
    """Writes [x | r | z] into the output tile (deterministic path)."""
    d1 = input_dim
    d2 = input_dim + latent_dim
    d3 = d2 + latent_dim

    def kernel(x_ref, r_ref, z_ref, o_ref):
        o_ref[:, 0:d1] = x_ref[...]
        o_ref[:, d1:d2] = r_ref[...]
        o_ref[:, d2:d3] = z_ref[...]

    return kernel


def _concat2_kernel(input_dim: int, latent_dim: int):
    """Writes [x | z] into the output tile (no deterministic path, no r DMA)."""
    d1 = input_dim
    d2 = input_dim + latent_dim

    def kernel(x_ref, z_ref, o_ref):
        o_ref[:, 0:d1] = x_ref[...]
        o_ref[:, d1:d2] = z_ref[...]

    return kernel


def np_head_decoder_input(x, z, r=None, *, use_deterministic: bool = True,
                          tile_b: int = _DEFAULT_TILE_B):
    """Pallas implementation of the NP_HEAD decoder-input assembly.

    x : (B, input_dim)
    z : (B, latent_dim)   sampled latent
    r : (B, latent_dim)   deterministic-path representation (only when
                          use_deterministic=True; otherwise ignored/None)
    returns (B, decoder_input_dim) where
        decoder_input_dim = input_dim + 2*latent_dim   (use_deterministic)
                          = input_dim + latent_dim     (otherwise)
    """
    B, input_dim = x.shape
    Bz, latent_dim = z.shape
    assert Bz == B, "x and z must share the batch dimension"

    if use_deterministic:
        assert r is not None and r.shape == (B, latent_dim), \
            "deterministic path requires r of shape (B, latent_dim)"
        decoder_input_dim = input_dim + 2 * latent_dim
        kernel = _concat3_kernel(input_dim, latent_dim)
        operands = (x, r, z)
        feat_dims = (input_dim, latent_dim, latent_dim)
    else:
        decoder_input_dim = input_dim + latent_dim
        kernel = _concat2_kernel(input_dim, latent_dim)
        operands = (x, z)
        feat_dims = (input_dim, latent_dim)

    # Batch tiling:
    #   * B <= tile_b -> single full-extent block (legal for any B).
    #   * otherwise   -> tile_b-row tiles (multiple of 8 -> sublane-legal for
    #     f32/bf16/int8 packing alike); trailing partial block handled by
    #     Pallas automatically.
    tb = B if B <= tile_b else tile_b
    grid = (pl.cdiv(B, tb),)
    row_map = lambda i: (i, 0)

    in_specs = [pl.BlockSpec((tb, d), row_map) for d in feat_dims]
    out_spec = pl.BlockSpec((tb, decoder_input_dim), row_map)

    # VMEM budget: double-buffered input + output tiles with headroom, kept
    # well under v7x's 64 MiB physical VMEM.
    itemsize = jnp.dtype(x.dtype).itemsize
    per_step_bytes = tb * (sum(feat_dims) + decoder_input_dim) * itemsize
    vmem_limit = int(min(48 * 1024 * 1024,
                         max(8 * 1024 * 1024, 4 * per_step_bytes)))

    return pl.pallas_call(
        kernel,
        out_shape=jax.ShapeDtypeStruct((B, decoder_input_dim), x.dtype),
        grid=grid,
        in_specs=in_specs,
        out_specs=out_spec,
        compiler_params=pltpu.CompilerParams(
            dimension_semantics=("parallel",),
            vmem_limit_bytes=vmem_limit,
        ),
    )(*operands)


class NPHeadPallas:
    """JAX/Pallas mirror of the NP_HEAD base module (no trainable parameters)."""

    def __init__(self, input_dim, latent_dim, num_classes, n_tasks, cls_per_task,
                 num_layers=2, xavier_init=False, num_attn_heads=4,
                 label_embedder=False, task_to_classes_map=None,
                 use_deterministic=True):
        self.input_dim = input_dim
        self.latent_dim = latent_dim
        self.num_classes = num_classes
        self.latent_encoder = None          # same as the PyTorch base class
        self.num_layers = num_layers
        self.decoder_input_dim = input_dim + latent_dim * 2
        if not use_deterministic:
            self.decoder_input_dim -= latent_dim
        self.xavier_init = xavier_init
        self.n_tasks = n_tasks
        self.cls_per_task = cls_per_task
        self.use_deterministic = use_deterministic

    def decoder_input(self, x, r, z):
        if self.use_deterministic:
            out = np_head_decoder_input(x, z, r=r, use_deterministic=True)
        else:
            # r is not part of the decoder input -> never DMA'd.
            out = np_head_decoder_input(x, z, use_deterministic=False)
        assert out.shape[-1] == self.decoder_input_dim
        return out

    def forward(self, *args, **kwargs):
        # TODO(synk): abstract in the reference (raises NotImplementedError).
        raise NotImplementedError


if __name__ == "__main__":
    # Lane-aligned feature dims (multiples of 128) -> unmasked output stores.
    # Batch of 512 with 256-row tiles exercises the tiled, pipelined path
    # (2 grid steps) while staying small.
    B = 512
    input_dim = 256
    latent_dim = 128
    num_classes = 10
    n_tasks = 5
    cls_per_task = 2

    key = jax.random.PRNGKey(0)
    kx, kr, kz = jax.random.split(key, 3)
    x = jax.random.normal(kx, (B, input_dim), dtype=jnp.float32)
    r = jax.random.normal(kr, (B, latent_dim), dtype=jnp.float32)
    z = jax.random.normal(kz, (B, latent_dim), dtype=jnp.float32)

    # Deterministic path: [x | r | z]  (tiled: 2 grid steps of 256 rows)
    head = NPHeadPallas(input_dim, latent_dim, num_classes, n_tasks,
                        cls_per_task, use_deterministic=True)
    out = jax.block_until_ready(
        np_head_decoder_input(x, z, r=r, use_deterministic=True, tile_b=256))
    ref = jnp.concatenate([x, r, z], axis=-1)
    assert out.shape == (B, head.decoder_input_dim)
    assert jnp.allclose(out, ref), "Pallas output mismatch (deterministic path)"

    # Also exercise the class wrapper (single full-extent block path).
    out2 = jax.block_until_ready(head.decoder_input(x, r, z))
    assert jnp.allclose(out2, ref), "Pallas output mismatch (wrapper path)"

    # Non-deterministic path: [x | z]  (2-input kernel, small batch -> one block)
    head_nd = NPHeadPallas(input_dim, latent_dim, num_classes, n_tasks,
                           cls_per_task, use_deterministic=False)
    out_nd = jax.block_until_ready(head_nd.decoder_input(x[:64], None, z[:64]))
    ref_nd = jnp.concatenate([x[:64], z[:64]], axis=-1)
    assert out_nd.shape == (64, head_nd.decoder_input_dim)
    assert jnp.allclose(out_nd, ref_nd), "Pallas output mismatch (no-det path)"

    print("KERNEL_OK")
</pallas_src>

<mosaic_0001>
module attributes {stable_mosaic.version = 11 : i64} {
  func.func @kernel(%arg0: i32, %arg1: memref<256x256xf32, #tpu.memory_space<vmem>>, %arg2: memref<256x128xf32, #tpu.memory_space<vmem>>, %arg3: memref<256x128xf32, #tpu.memory_space<vmem>>, %arg4: memref<256x512xf32, #tpu.memory_space<vmem>>) attributes {dimension_semantics = [#tpu.dimension_semantics<parallel>], iteration_bounds = array<i64: 2>, scalar_prefetch = 0 : i64, scratch_operands = 0 : i64, tpu.core_type = #tpu.core_type<tc>, window_params = [{transform_indices = @transform_0, window_bounds = array<i64: 256, 256>}, {transform_indices = @transform_1, window_bounds = array<i64: 256, 128>}, {transform_indices = @transform_2, window_bounds = array<i64: 256, 128>}, {transform_indices = @transform_3, window_bounds = array<i64: 256, 512>}]} {
    %c0 = arith.constant 0 : index
    %c0_0 = arith.constant 0 : index
    %0 = vector.load %arg1[%c0, %c0_0] : memref<256x256xf32, #tpu.memory_space<vmem>>, vector<256x256xf32>
    %c0_1 = arith.constant 0 : index
    %c0_2 = arith.constant 0 : index
    %1 = vector.load %arg4[%c0_1, %c0_2] : memref<256x512xf32, #tpu.memory_space<vmem>>, vector<256x256xf32>
    tpu.vector_store %arg4[%c0_1, %c0_2], %0 {strides = array<i32>} : memref<256x512xf32, #tpu.memory_space<vmem>>, vector<256x256xf32>,
    %c0_3 = arith.constant 0 : index
    %c0_4 = arith.constant 0 : index
    %2 = vector.load %arg2[%c0_3, %c0_4] : memref<256x128xf32, #tpu.memory_space<vmem>>, vector<256x128xf32>
    %c0_5 = arith.constant 0 : index
    %c256 = arith.constant 256 : index
    %3 = vector.load %arg4[%c0_5, %c256] : memref<256x512xf32, #tpu.memory_space<vmem>>, vector<256x128xf32>
    tpu.vector_store %arg4[%c0_5, %c256], %2 {strides = array<i32>} : memref<256x512xf32, #tpu.memory_space<vmem>>, vector<256x128xf32>,
    %c0_6 = arith.constant 0 : index
    %c0_7 = arith.constant 0 : index
    %4 = vector.load %arg3[%c0_6, %c0_7] : memref<256x128xf32, #tpu.memory_space<vmem>>, vector<256x128xf32>
    %c0_8 = arith.constant 0 : index
    %c384 = arith.constant 384 : index
    %5 = vector.load %arg4[%c0_8, %c384] : memref<256x512xf32, #tpu.memory_space<vmem>>, vector<256x128xf32>
    tpu.vector_store %arg4[%c0_8, %c384], %4 {strides = array<i32>} : memref<256x512xf32, #tpu.memory_space<vmem>>, vector<256x128xf32>,
    return
  }
  func.func @transform_0(%arg0: i32) -> (i32, i32) {
    %c0_i32 = arith.constant 0 : i32
    %c0_i32_0 = arith.constant 0 : i32
    return %arg0, %c0_i32 : i32, i32
  }
  func.func @transform_1(%arg0: i32) -> (i32, i32) {
    %c0_i32 = arith.constant 0 : i32
    %c0_i32_0 = arith.constant 0 : i32
    return %arg0, %c0_i32 : i32, i32
  }
  func.func @transform_2(%arg0: i32) -> (i32, i32) {
    %c0_i32 = arith.constant 0 : i32
    %c0_i32_0 = arith.constant 0 : i32
    return %arg0, %c0_i32 : i32, i32
  }
  func.func @transform_3(%arg0: i32) -> (i32, i32) {
    %c0_i32 = arith.constant 0 : i32
    %c0_i32_0 = arith.constant 0 : i32
    return %arg0, %c0_i32 : i32, i32
  }
}

</mosaic_0001>

<llo_original>
// kernel: tpu_custom_call.1
$region0: #{tpu_custom_call.1}
  #allocation0 [shape = 'u32[]', space=smem, size = 0x4, offset = 0x4, fixed_abs, tag = 'smem constant byte address 0x4 - core index']
  #allocation1 [shape = 'u32[144,128]{1,0:T(1,128)}', space=vmem, size = 0x12000, scoped, tag = 'internal scratch']
  %s0 = inlined_call_operand.hbm [shape: f32[512,256], index: 0, kind: input, shape index: {}]
  %s1 = inlined_call_operand.hbm [shape: f32[512,128], index: 1, kind: input, shape index: {}]
  %s2 = inlined_call_operand.hbm [shape: f32[512,128], index: 2, kind: input, shape index: {}]
  %s3 = inlined_call_operand.hbm [shape: f32[512,512], index: 3, kind: output, shape index: {}]
  %s4 = sld [smem:[#allocation0]]
  $region57: #{tpu_custom_call.1} parent=0
    _
  %s6 = ssub.s32 1, %s4
  %s7 = scalar_select 0, %s6, %s4
  $region1: #{tpu_custom_call.1} parent=0
    #allocation2 [shape = 'u8[524288]{0}', space=vmem, size = 0x80000, scoped, tag = 'input window, operand 0']
    #allocation3 [shape = 's32[2]{0}', space=sflag, size = 0x8, scoped, tag = 'scoped memory for tpu_custom_call.1']
    #allocation4 [shape = 's32[2]{0}', space=sflag, size = 0x8, scoped, tag = 'scoped memory for tpu_custom_call.1']
    #allocation5 [shape = 'u8[262144]{0}', space=vmem, size = 0x40000, scoped, tag = 'input window, operand 1']
    #allocation6 [shape = 's32[2]{0}', space=sflag, size = 0x8, scoped, tag = 'scoped memory for tpu_custom_call.1']
    #allocation7 [shape = 'u8[262144]{0}', space=vmem, size = 0x40000, scoped, tag = 'input window, operand 2']
    #allocation8 [shape = 'u8[1048576]{0}', space=vmem, size = 0x100000, scoped, tag = 'output window, operand 0']
    %8 = vsyncpa [#allocation3], 0
    %s9 = scalar_lea.sflag [#allocation3], 1
    %10 = vsyncpa %s9, 0
    %11 = vsyncpa [#allocation6], 0
    %s12 = scalar_lea.sflag [#allocation6], 1
    %13 = vsyncpa %s12, 0
    %14 = vsyncpa [#allocation4], 0
    %s15 = scalar_lea.sflag [#allocation4], 1
    %16 = vsyncpa %s15, 0
    loop: start=0, step=1, limit=4
    $region2: #{tpu_custom_call.1} parent=1 // loop_pre_header
      _
    $region3: #{tpu_custom_call.1} parent=1 // loop_header
      %s18 = sphi 0, %s22
      %p19 = scmp.ge.s32.totalorder %s18, 4
      %s28 = sphi 0, %s30
      %s31 = sphi 0, %s28
      %s32 = sphi 0, %s31
      %s48 = sphi 0, %s32
      %s54 = sphi 0, %s56
      %s57 = sphi 0, %s54
      %s58 = sphi 0, %s57
      %s74 = sphi 0, %s58
      %s80 = sphi 0, %s82
      %s83 = sphi 0, %s80
      %s84 = sphi 0, %s83
      %s100 = sphi 0, %s84
      %s106 = sphi 0, %s108
      %s109 = sphi 0, %s106
      %s110 = sphi 0, %s109
      %s126 = sphi 0, %s110
    $region4: #{tpu_custom_call.1} parent=1 // loop_header_branch
      %21 = sbr.rel (%p19) target = $region8
    $region5: #{tpu_custom_call.1} parent=1 // loop_body
      %s23 = ssub.s32 %s18, 1
      %s24 = ssub.s32 %s18, 2
      %s25 = sadd.s32 %s18, 1
      %s26 = ssub.s32 %s18, %s25
      %p27 = scmp.eq.s32.totalorder %s26, 0
      %s29 = sadd.s32 %s28, 1
      %s30 = scalar_select %p27, %s28, %s29
      %p33 = pneg %p27
      %p34 = scmp.eq.s32.totalorder %s18, 1
      %p35 = por %p33, %p34
      %p36 = scmp.ne.s32.totalorder %s28, %s31
      %p37 = scmp.eq.s32.totalorder %s18, 0
      %p38 = por %p36, %p37
      %p39 = scmp.ne.s32.totalorder %s28, %s31
      %p40 = scmp.eq.s32.totalorder %s23, 1
      %p41 = por %p39, %p40
      %p42 = scmp.ne.s32.totalorder %s31, %s32
      %p43 = scmp.eq.s32.totalorder %s23, 0
      %p44 = por %p42, %p43
      %p45 = scmp.ne.s32.totalorder %s31, %s32
      %p46 = scmp.eq.s32.totalorder %s24, 1
      %p47 = por %p45, %p46
      %p49 = scmp.ne.s32.totalorder %s32, %s48
      %p50 = scmp.eq.s32.totalorder %s24, 0
      %p51 = por %p49, %p50
      %s52 = ssub.s32 %s18, %s25
      %p53 = scmp.eq.s32.totalorder %s52, 0
      %s55 = sadd.s32 %s54, 1
      %s56 = scalar_select %p53, %s54, %s55
      %p59 = pneg %p53
      %p60 = scmp.eq.s32.totalorder %s18, 1
      %p61 = por %p59, %p60
      %p62 = scmp.ne.s32.totalorder %s54, %s57
      %p63 = scmp.eq.s32.totalorder %s18, 0
      %p64 = por %p62, %p63
      %p65 = scmp.ne.s32.totalorder %s54, %s57
      %p66 = scmp.eq.s32.totalorder %s23, 1
      %p67 = por %p65, %p66
      %p68 = scmp.ne.s32.totalorder %s57, %s58
      %p69 = scmp.eq.s32.totalorder %s23, 0
      %p70 = por %p68, %p69
      %p71 = scmp.ne.s32.totalorder %s57, %s58
      %p72 = scmp.eq.s32.totalorder %s24, 1
      %p73 = por %p71, %p72
      %p75 = scmp.ne.s32.totalorder %s58, %s74
      %p76 = scmp.eq.s32.totalorder %s24, 0
      %p77 = por %p75, %p76
      %s78 = ssub.s32 %s18, %s25
      %p79 = scmp.eq.s32.totalorder %s78, 0
      %s81 = sadd.s32 %s80, 1
      %s82 = scalar_select %p79, %s80, %s81
      %p85 = pneg %p79
      %p86 = scmp.eq.s32.totalorder %s18, 1
      %p87 = por %p85, %p86
      %p88 = scmp.ne.s32.totalorder %s80, %s83
      %p89 = scmp.eq.s32.totalorder %s18, 0
      %p90 = por %p88, %p89
      %p91 = scmp.ne.s32.totalorder %s80, %s83
      %p92 = scmp.eq.s32.totalorder %s23, 1
      %p93 = por %p91, %p92
      %p94 = scmp.ne.s32.totalorder %s83, %s84
      %p95 = scmp.eq.s32.totalorder %s23, 0
      %p96 = por %p94, %p95
      %p97 = scmp.ne.s32.totalorder %s83, %s84
      %p98 = scmp.eq.s32.totalorder %s24, 1
      %p99 = por %p97, %p98
      %p101 = scmp.ne.s32.totalorder %s84, %s100
      %p102 = scmp.eq.s32.totalorder %s24, 0
      %p103 = por %p101, %p102
      %s104 = ssub.s32 %s18, %s25
      %p105 = scmp.eq.s32.totalorder %s104, 0
      %s107 = sadd.s32 %s106, 1
      %s108 = scalar_select %p105, %s106, %s107
      %p111 = pneg %p105
      %p112 = scmp.eq.s32.totalorder %s18, 1
      %p113 = por %p111, %p112
      %p114 = scmp.ne.s32.totalorder %s106, %s109
      %p115 = scmp.eq.s32.totalorder %s18, 0
      %p116 = por %p114, %p115
      %p117 = scmp.ne.s32.totalorder %s106, %s109
      %p118 = scmp.eq.s32.totalorder %s23, 1
      %p119 = por %p117, %p118
      %p120 = scmp.ne.s32.totalorder %s109, %s110
      %p121 = scmp.eq.s32.totalorder %s23, 0
      %p122 = por %p120, %p121
      %p123 = scmp.ne.s32.totalorder %s109, %s110
      %p124 = scmp.eq.s32.totalorder %s24, 1
      %p125 = por %p123, %p124
      %p127 = scmp.ne.s32.totalorder %s110, %s126
      %p128 = scmp.eq.s32.totalorder %s24, 0
      %p129 = por %p127, %p128
      %p130 = scmp.le.s32.totalorder 1, %s18
      %p131 = scmp.lt.s32.totalorder %s18, 3
      %p132 = pnand %p130, %p131
      %p133 = pneg %p132
      // Predicated region
      $region9: #{tpu_custom_call.1} parent=5 // pred_check
        _
      $region10: #{tpu_custom_call.1} parent=5 // pred_check_branch
        %135 = sbr.rel (%p132) target = $region12
      $region11: #{tpu_custom_call.1} parent=5 // pred_region
        %s136 = ssub.s32 %s18, 1
      $region12: #{tpu_custom_call.1} parent=5 // pred_fallthru
        _
      %p137 = scmp.lt.s32.totalorder %s18, 2
      // Predicated region
      $region13: #{tpu_custom_call.1} parent=5 // pred_check
        %p138 = pneg %p137
      $region14: #{tpu_custom_call.1} parent=5 // pred_check_branch
        %140 = sbr.rel (%p138) target = $region16
      $region15: #{tpu_custom_call.1} parent=5 // pred_region
        // Predicated region
        $region17: #{tpu_custom_call.1} parent=15 // pred_check
          %p141 = pneg %p38
        $region18: #{tpu_custom_call.1} parent=15 // pred_check_branch
          %143 = sbr.rel (%p141) target = $region20
        $region19: #{tpu_custom_call.1} parent=15 // pred_region
          %s144 = sand.u32 %s28, 1
          %s145 = scalar_lea.sflag [#allocation3], %s144
          %s146 = sand.u32 %s28, 1
          %s147 = smul.addr %s146, 512
          %s148 = scalar_lea.vmem [#allocation2], %s147
          %s149 = smul.u32 32, %s18
          %s151 = ssub.s32 8192, 8192
          %152 = vsyncadd %s145, %s151
          %s153 = smul.addr %s149, 2
          %s154 = smul.addr %s153, 128
          %s155 = scalar_lea.hbm %s0, %s154
          %s156 = sshll.u32 %s148, 4
          %s157 = int_to_ptr.vmem [resolvable:$true] %s156
          %162 = dma.hbm_to_vmem [thread:$0]  %s155, 8192, %s157, %s145, 256, 256, 16
        $region20: #{tpu_custom_call.1} parent=15 // pred_fallthru
          _
        // Predicated region
        $region21: #{tpu_custom_call.1} parent=15 // pred_check
          %p163 = pneg %p64
        $region22: #{tpu_custom_call.1} parent=15 // pred_check_branch
          %165 = sbr.rel (%p163) target = $region24
        $region23: #{tpu_custom_call.1} parent=15 // pred_region
          %s166 = sand.u32 %s18, 1
          %s167 = scalar_lea.sflag [#allocation6], %s166
          %s168 = sand.u32 %s54, 1
          %s169 = smul.addr %s168, 256
          %s170 = scalar_lea.vmem [#allocation5], %s169
          %s171 = smul.u32 32, %s18
          %s173 = ssub.s32 4096, 4096
          %174 = vsyncadd %s167, %s173
          %s175 = smul.addr %s171, 128
          %s176 = scalar_lea.hbm %s1, %s175
          %s177 = sshll.u32 %s170, 4
          %s178 = int_to_ptr.vmem [resolvable:$true] %s177
          %183 = dma.hbm_to_vmem [thread:$0]  %s176, 4096, %s178, %s167, 128, 128, 8
        $region24: #{tpu_custom_call.1} parent=15 // pred_fallthru
          _
        // Predicated region
        $region25: #{tpu_custom_call.1} parent=15 // pred_check
          %p184 = pneg %p90
        $region26: #{tpu_custom_call.1} parent=15 // pred_check_branch
          %186 = sbr.rel (%p184) target = $region28
        $region27: #{tpu_custom_call.1} parent=15 // pred_region
          %s187 = sand.u32 %s18, 1
          %s188 = scalar_lea.sflag [#allocation6], %s187
          %s189 = sand.u32 %s80, 1
          %s190 = smul.addr %s189, 256
          %s191 = scalar_lea.vmem [#allocation7], %s190
          %s192 = smul.u32 32, %s18
          %s194 = ssub.s32 4096, 4096
          %195 = vsyncadd %s188, %s194
          %s196 = smul.addr %s192, 128
          %s197 = scalar_lea.hbm %s2, %s196
          %s198 = sshll.u32 %s191, 4
          %s199 = int_to_ptr.vmem [resolvable:$true] %s198
          %204 = dma.hbm_to_vmem [thread:$0]  %s197, 4096, %s199, %s188, 128, 128, 8
        $region28: #{tpu_custom_call.1} parent=15 // pred_fallthru
          _
      $region16: #{tpu_custom_call.1} parent=5 // pred_fallthru
        _
      %p205 = scmp.le.s32.totalorder 1, %s18
      %p206 = scmp.lt.s32.totalorder %s18, 3
      %p207 = pnand %p205, %p206
      %p208 = pneg %p207
      // Predicated region
      $region29: #{tpu_custom_call.1} parent=5 // pred_check
        _
      $region30: #{tpu_custom_call.1} parent=5 // pred_check_branch
        %210 = sbr.rel (%p207) target = $region32
      $region31: #{tpu_custom_call.1} parent=5 // pred_region
        %s211 = ssub.s32 %s18, 1
        %s212 = sand.u32 %s31, 1
        %s213 = scalar_lea.sflag [#allocation3], %s212
        %s214 = sand.u32 %s31, 1
        %s215 = smul.addr %s214, 512
        %s216 = scalar_lea.vmem [#allocation2], %s215
        // Predicated region
        $region33: #{tpu_custom_call.1} parent=31 // pred_check
          %p217 = pneg %p44
        $region34: #{tpu_custom_call.1} parent=31 // pred_check_branch
          %219 = sbr.rel (%p217) target = $region36
        $region35: #{tpu_custom_call.1} parent=31 // pred_region
          %220 = dma.done %s213, 8192
        $region36: #{tpu_custom_call.1} parent=31 // pred_fallthru
          _
        %s221 = sand.u32 %s23, 1
        %s222 = scalar_lea.sflag [#allocation6], %s221
        %s223 = sand.u32 %s57, 1
        %s224 = smul.addr %s223, 256
        %s225 = scalar_lea.vmem [#allocation5], %s224
        // Predicated region
        $region37: #{tpu_custom_call.1} parent=31 // pred_check
          %p226 = pneg %p70
        $region38: #{tpu_custom_call.1} parent=31 // pred_check_branch
          %228 = sbr.rel (%p226) target = $region40
        $region39: #{tpu_custom_call.1} parent=31 // pred_region
          %229 = dma.done %s222, 4096
        $region40: #{tpu_custom_call.1} parent=31 // pred_fallthru
          _
        %s230 = sand.u32 %s23, 1
        %s231 = scalar_lea.sflag [#allocation6], %s230
        %s232 = sand.u32 %s83, 1
        %s233 = smul.addr %s232, 256
        %s234 = scalar_lea.vmem [#allocation7], %s233
        // Predicated region
        $region41: #{tpu_custom_call.1} parent=31 // pred_check
          %p235 = pneg %p96
        $region42: #{tpu_custom_call.1} parent=31 // pred_check_branch
          %237 = sbr.rel (%p235) target = $region44
        $region43: #{tpu_custom_call.1} parent=31 // pred_region
          %238 = dma.done %s231, 4096
        $region44: #{tpu_custom_call.1} parent=31 // pred_fallthru
          _
        %s239 = sand.u32 %s31, 1
        %s240 = scalar_lea.sflag [#allocation3], %s239
        %s241 = sand.u32 %s31, 1
        %s242 = smul.addr %s241, 512
        %s243 = scalar_lea.vmem [#allocation2], %s242
        %p244 = pneg %p44
        %p245 = pneg %p41
        %s246 = sand.u32 %s23, 1
        %s247 = scalar_lea.sflag [#allocation6], %s246
        %s248 = sand.u32 %s57, 1
        %s249 = smul.addr %s248, 256
        %s250 = scalar_lea.vmem [#allocation5], %s249
        %p251 = pneg %p70
        %p252 = pneg %p67
        %s253 = sand.u32 %s23, 1
        %s254 = scalar_lea.sflag [#allocation6], %s253
        %s255 = sand.u32 %s83, 1
        %s256 = smul.addr %s255, 256
        %s257 = scalar_lea.vmem [#allocation7], %s256
        %p258 = pneg %p96
        %p259 = pneg %p93
        %p260 = pneg %p122
        %p261 = pneg %p119
        %s262 = sand.u32 %s109, 1
        %s263 = scalar_lea.sflag [#allocation4], %s262
        %s264 = sand.u32 %s109, 1
        %s265 = smul.addr %s264, 1024
        %s266 = scalar_lea.vmem [#allocation8], %s265
        %s267 = smul.u32 32, %s23
        %s268 = smul.u32 32, %s23
        %s269 = smul.u32 32, %s23
        %s270 = smul.u32 32, %s23
        %v271 = vld [vmem:[%s216] sm:$0xff]
        %v272 = vld [vmem:[%s216 + $0x8] sm:$0xff]
        %v273 = vld [vmem:[%s216 + $0x10] sm:$0xff]
        %v274 = vld [vmem:[%s216 + $0x18] sm:$0xff]
        %v275 = vld [vmem:[%s216 + $0x20] sm:$0xff]
        %v276 = vld [vmem:[%s216 + $0x28] sm:$0xff]
        %v277 = vld [vmem:[%s216 + $0x30] sm:$0xff]
        %v278 = vld [vmem:[%s216 + $0x38] sm:$0xff]
        %v279 = vld [vmem:[%s216 + $0x40] sm:$0xff]
        %v280 = vld [vmem:[%s216 + $0x48] sm:$0xff]
        %v281 = vld [vmem:[%s216 + $0x50] sm:$0xff]
        %v282 = vld [vmem:[%s216 + $0x58] sm:$0xff]
        %v283 = vld [vmem:[%s216 + $0x60] sm:$0xff]
        %v284 = vld [vmem:[%s216 + $0x68] sm:$0xff]
        %v285 = vld [vmem:[%s216 + $0x70] sm:$0xff]
        %v286 = vld [vmem:[%s216 + $0x78] sm:$0xff]
        %v287 = vld [vmem:[%s216 + $0x80] sm:$0xff]
        %v288 = vld [vmem:[%s216 + $0x88] sm:$0xff]
        %v289 = vld [vmem:[%s216 + $0x90] sm:$0xff]
        %v290 = vld [vmem:[%s216 + $0x98] sm:$0xff]
        %v291 = vld [vmem:[%s216 + $0xa0] sm:$0xff]
        %v292 = vld [vmem:[%s216 + $0xa8] sm:$0xff]
        %v293 = vld [vmem:[%s216 + $0xb0] sm:$0xff]
        %v294 = vld [vmem:[%s216 + $0xb8] sm:$0xff]
        %v295 = vld [vmem:[%s216 + $0xc0] sm:$0xff]
        %v296 = vld [vmem:[%s216 + $0xc8] sm:$0xff]
        %v297 = vld [vmem:[%s216 + $0xd0] sm:$0xff]
        %v298 = vld [vmem:[%s216 + $0xd8] sm:$0xff]
        %v299 = vld [vmem:[%s216 + $0xe0] sm:$0xff]
        %v300 = vld [vmem:[%s216 + $0xe8] sm:$0xff]
        %v301 = vld [vmem:[%s216 + $0xf0] sm:$0xff]
        %v302 = vld [vmem:[%s216 + $0xf8] sm:$0xff]
        %v303 = vld [vmem:[%s216 + $0x100] sm:$0xff]
        %v304 = vld [vmem:[%s216 + $0x108] sm:$0xff]
        %v305 = vld [vmem:[%s216 + $0x110] sm:$0xff]
        %v306 = vld [vmem:[%s216 + $0x118] sm:$0xff]
        %v307 = vld [vmem:[%s216 + $0x120] sm:$0xff]
        %v308 = vld [vmem:[%s216 + $0x128] sm:$0xff]
        %v309 = vld [vmem:[%s216 + $0x130] sm:$0xff]
        %v310 = vld [vmem:[%s216 + $0x138] sm:$0xff]
        %v311 = vld [vmem:[%s216 + $0x140] sm:$0xff]
        %v312 = vld [vmem:[%s216 + $0x148] sm:$0xff]
        %v313 = vld [vmem:[%s216 + $0x150] sm:$0xff]
        %v314 = vld [vmem:[%s216 + $0x158] sm:$0xff]
        %v315 = vld [vmem:[%s216 + $0x160] sm:$0xff]
        %v316 = vld [vmem:[%s216 + $0x168] sm:$0xff]
        %v317 = vld [vmem:[%s216 + $0x170] sm:$0xff]
        %v318 = vld [vmem:[%s216 + $0x178] sm:$0xff]
        %v319 = vld [vmem:[%s216 + $0x180] sm:$0xff]
        %v320 = vld [vmem:[%s216 + $0x188] sm:$0xff]
        %v321 = vld [vmem:[%s216 + $0x190] sm:$0xff]
        %v322 = vld [vmem:[%s216 + $0x198] sm:$0xff]
        %v323 = vld [vmem:[%s216 + $0x1a0] sm:$0xff]
        %v324 = vld [vmem:[%s216 + $0x1a8] sm:$0xff]
        %v325 = vld [vmem:[%s216 + $0x1b0] sm:$0xff]
        %v326 = vld [vmem:[%s216 + $0x1b8] sm:$0xff]
        %v327 = vld [vmem:[%s216 + $0x1c0] sm:$0xff]
        %v328 = vld [vmem:[%s216 + $0x1c8] sm:$0xff]
        %v329 = vld [vmem:[%s216 + $0x1d0] sm:$0xff]
        %v330 = vld [vmem:[%s216 + $0x1d8] sm:$0xff]
        %v331 = vld [vmem:[%s216 + $0x1e0] sm:$0xff]
        %v332 = vld [vmem:[%s216 + $0x1e8] sm:$0xff]
        %v333 = vld [vmem:[%s216 + $0x1f0] sm:$0xff]
        %v334 = vld [vmem:[%s216 + $0x1f8] sm:$0xff]
        %335 = vst [vmem:[%s266] sm:$0xff] %v271
        %336 = vst [vmem:[%s266 + $0x8] sm:$0xff] %v272
        %337 = vst [vmem:[%s266 + $0x20] sm:$0xff] %v273
        %338 = vst [vmem:[%s266 + $0x28] sm:$0xff] %v274
        %339 = vst [vmem:[%s266 + $0x40] sm:$0xff] %v275
        %340 = vst [vmem:[%s266 + $0x48] sm:$0xff] %v276
        %341 = vst [vmem:[%s266 + $0x60] sm:$0xff] %v277
        %342 = vst [vmem:[%s266 + $0x68] sm:$0xff] %v278
        %343 = vst [vmem:[%s266 + $0x80] sm:$0xff] %v279
        %344 = vst [vmem:[%s266 + $0x88] sm:$0xff] %v280
        %345 = vst [vmem:[%s266 + $0xa0] sm:$0xff] %v281
        %346 = vst [vmem:[%s266 + $0xa8] sm:$0xff] %v282
        %347 = vst [vmem:[%s266 + $0xc0] sm:$0xff] %v283
        %348 = vst [vmem:[%s266 + $0xc8] sm:$0xff] %v284
        %349 = vst [vmem:[%s266 + $0xe0] sm:$0xff] %v285
        %350 = vst [vmem:[%s266 + $0xe8] sm:$0xff] %v286
        %351 = vst [vmem:[%s266 + $0x100] sm:$0xff] %v287
        %352 = vst [vmem:[%s266 + $0x108] sm:$0xff] %v288
        %353 = vst [vmem:[%s266 + $0x120] sm:$0xff] %v289
        %354 = vst [vmem:[%s266 + $0x128] sm:$0xff] %v290
        %355 = vst [vmem:[%s266 + $0x140] sm:$0xff] %v291
        %356 = vst [vmem:[%s266 + $0x148] sm:$0xff] %v292
        %357 = vst [vmem:[%s266 + $0x160] sm:$0xff] %v293
        %358 = vst [vmem:[%s266 + $0x168] sm:$0xff] %v294
        %359 = vst [vmem:[%s266 + $0x180] sm:$0xff] %v295
        %360 = vst [vmem:[%s266 + $0x188] sm:$0xff] %v296
        %361 = vst [vmem:[%s266 + $0x1a0] sm:$0xff] %v297
        %362 = vst [vmem:[%s266 + $0x1a8] sm:$0xff] %v298
        %363 = vst [vmem:[%s266 + $0x1c0] sm:$0xff] %v299
        %364 = vst [vmem:[%s266 + $0x1c8] sm:$0xff] %v300
        %365 = vst [vmem:[%s266 + $0x1e0] sm:$0xff] %v301
        %366 = vst [vmem:[%s266 + $0x1e8] sm:$0xff] %v302
        %367 = vst [vmem:[%s266 + $0x200] sm:$0xff] %v303
        %368 = vst [vmem:[%s266 + $0x208] sm:$0xff] %v304
        %369 = vst [vmem:[%s266 + $0x220] sm:$0xff] %v305
        %370 = vst [vmem:[%s266 + $0x228] sm:$0xff] %v306
        %371 = vst [vmem:[%s266 + $0x240] sm:$0xff] %v307
        %372 = vst [vmem:[%s266 + $0x248] sm:$0xff] %v308
        %373 = vst [vmem:[%s266 + $0x260] sm:$0xff] %v309
        %374 = vst [vmem:[%s266 + $0x268] sm:$0xff] %v310
        %375 = vst [vmem:[%s266 + $0x280] sm:$0xff] %v311
        %376 = vst [vmem:[%s266 + $0x288] sm:$0xff] %v312
        %377 = vst [vmem:[%s266 + $0x2a0] sm:$0xff] %v313
        %378 = vst [vmem:[%s266 + $0x2a8] sm:$0xff] %v314
        %379 = vst [vmem:[%s266 + $0x2c0] sm:$0xff] %v315
        %380 = vst [vmem:[%s266 + $0x2c8] sm:$0xff] %v316
        %381 = vst [vmem:[%s266 + $0x2e0] sm:$0xff] %v317
        %382 = vst [vmem:[%s266 + $0x2e8] sm:$0xff] %v318
        %383 = vst [vmem:[%s266 + $0x300] sm:$0xff] %v319
        %384 = vst [vmem:[%s266 + $0x308] sm:$0xff] %v320
        %385 = vst [vmem:[%s266 + $0x320] sm:$0xff] %v321
        %386 = vst [vmem:[%s266 + $0x328] sm:$0xff] %v322
        %387 = vst [vmem:[%s266 + $0x340] sm:$0xff] %v323
        %388 = vst [vmem:[%s266 + $0x348] sm:$0xff] %v324
        %389 = vst [vmem:[%s266 + $0x360] sm:$0xff] %v325
        %390 = vst [vmem:[%s266 + $0x368] sm:$0xff] %v326
        %391 = vst [vmem:[%s266 + $0x380] sm:$0xff] %v327
        %392 = vst [vmem:[%s266 + $0x388] sm:$0xff] %v328
        %393 = vst [vmem:[%s266 + $0x3a0] sm:$0xff] %v329
        %394 = vst [vmem:[%s266 + $0x3a8] sm:$0xff] %v330
        %395 = vst [vmem:[%s266 + $0x3c0] sm:$0xff] %v331
        %396 = vst [vmem:[%s266 + $0x3c8] sm:$0xff] %v332
        %397 = vst [vmem:[%s266 + $0x3e0] sm:$0xff] %v333
        %398 = vst [vmem:[%s266 + $0x3e8] sm:$0xff] %v334
        %v399 = vld [vmem:[%s225] sm:$0xff]
        %v400 = vld [vmem:[%s225 + $0x8] sm:$0xff]
        %v401 = vld [vmem:[%s225 + $0x10] sm:$0xff]
        %v402 = vld [vmem:[%s225 + $0x18] sm:$0xff]
        %v403 = vld [vmem:[%s225 + $0x20] sm:$0xff]
        %v404 = vld [vmem:[%s225 + $0x28] sm:$0xff]
        %v405 = vld [vmem:[%s225 + $0x30] sm:$0xff]
        %v406 = vld [vmem:[%s225 + $0x38] sm:$0xff]
        %v407 = vld [vmem:[%s225 + $0x40] sm:$0xff]
        %v408 = vld [vmem:[%s225 + $0x48] sm:$0xff]
        %v409 = vld [vmem:[%s225 + $0x50] sm:$0xff]
        %v410 = vld [vmem:[%s225 + $0x58] sm:$0xff]
        %v411 = vld [vmem:[%s225 + $0x60] sm:$0xff]
        %v412 = vld [vmem:[%s225 + $0x68] sm:$0xff]
        %v413 = vld [vmem:[%s225 + $0x70] sm:$0xff]
        %v414 = vld [vmem:[%s225 + $0x78] sm:$0xff]
        %v415 = vld [vmem:[%s225 + $0x80] sm:$0xff]
        %v416 = vld [vmem:[%s225 + $0x88] sm:$0xff]
        %v417 = vld [vmem:[%s225 + $0x90] sm:$0xff]
        %v418 = vld [vmem:[%s225 + $0x98] sm:$0xff]
        %v419 = vld [vmem:[%s225 + $0xa0] sm:$0xff]
        %v420 = vld [vmem:[%s225 + $0xa8] sm:$0xff]
        %v421 = vld [vmem:[%s225 + $0xb0] sm:$0xff]
        %v422 = vld [vmem:[%s225 + $0xb8] sm:$0xff]
        %v423 = vld [vmem:[%s225 + $0xc0] sm:$0xff]
        %v424 = vld [vmem:[%s225 + $0xc8] sm:$0xff]
        %v425 = vld [vmem:[%s225 + $0xd0] sm:$0xff]
        %v426 = vld [vmem:[%s225 + $0xd8] sm:$0xff]
        %v427 = vld [vmem:[%s225 + $0xe0] sm:$0xff]
        %v428 = vld [vmem:[%s225 + $0xe8] sm:$0xff]
        %v429 = vld [vmem:[%s225 + $0xf0] sm:$0xff]
        %v430 = vld [vmem:[%s225 + $0xf8] sm:$0xff]
        %431 = vst [vmem:[%s266 + $0x10] sm:$0xff] %v399
        %432 = vst [vmem:[%s266 + $0x30] sm:$0xff] %v400
        %433 = vst [vmem:[%s266 + $0x50] sm:$0xff] %v401
        %434 = vst [vmem:[%s266 + $0x70] sm:$0xff] %v402
        %435 = vst [vmem:[%s266 + $0x90] sm:$0xff] %v403
        %436 = vst [vmem:[%s266 + $0xb0] sm:$0xff] %v404
        %437 = vst [vmem:[%s266 + $0xd0] sm:$0xff] %v405
        %438 = vst [vmem:[%s266 + $0xf0] sm:$0xff] %v406
        %439 = vst [vmem:[%s266 + $0x110] sm:$0xff] %v407
        %440 = vst [vmem:[%s266 + $0x130] sm:$0xff] %v408
        %441 = vst [vmem:[%s266 + $0x150] sm:$0xff] %v409
        %442 = vst [vmem:[%s266 + $0x170] sm:$0xff] %v410
        %443 = vst [vmem:[%s266 + $0x190] sm:$0xff] %v411
        %444 = vst [vmem:[%s266 + $0x1b0] sm:$0xff] %v412
        %445 = vst [vmem:[%s266 + $0x1d0] sm:$0xff] %v413
        %446 = vst [vmem:[%s266 + $0x1f0] sm:$0xff] %v414
        %447 = vst [vmem:[%s266 + $0x210] sm:$0xff] %v415
        %448 = vst [vmem:[%s266 + $0x230] sm:$0xff] %v416
        %449 = vst [vmem:[%s266 + $0x250] sm:$0xff] %v417
        %450 = vst [vmem:[%s266 + $0x270] sm:$0xff] %v418
        %451 = vst [vmem:[%s266 + $0x290] sm:$0xff] %v419
        %452 = vst [vmem:[%s266 + $0x2b0] sm:$0xff] %v420
        %453 = vst [vmem:[%s266 + $0x2d0] sm:$0xff] %v421
        %454 = vst [vmem:[%s266 + $0x2f0] sm:$0xff] %v422
        %455 = vst [vmem:[%s266 + $0x310] sm:$0xff] %v423
        %456 = vst [vmem:[%s266 + $0x330] sm:$0xff] %v424
        %457 = vst [vmem:[%s266 + $0x350] sm:$0xff] %v425
        %458 = vst [vmem:[%s266 + $0x370] sm:$0xff] %v426
        %459 = vst [vmem:[%s266 + $0x390] sm:$0xff] %v427
        %460 = vst [vmem:[%s266 + $0x3b0] sm:$0xff] %v428
        %461 = vst [vmem:[%s266 + $0x3d0] sm:$0xff] %v429
        %462 = vst [vmem:[%s266 + $0x3f0] sm:$0xff] %v430
        %v463 = vld [vmem:[%s234] sm:$0xff]
        %v464 = vld [vmem:[%s234 + $0x8] sm:$0xff]
        %v465 = vld [vmem:[%s234 + $0x10] sm:$0xff]
        %v466 = vld [vmem:[%s234 + $0x18] sm:$0xff]
        %v467 = vld [vmem:[%s234 + $0x20] sm:$0xff]
        %v468 = vld [vmem:[%s234 + $0x28] sm:$0xff]
        %v469 = vld [vmem:[%s234 + $0x30] sm:$0xff]
        %v470 = vld [vmem:[%s234 + $0x38] sm:$0xff]
        %v471 = vld [vmem:[%s234 + $0x40] sm:$0xff]
        %v472 = vld [vmem:[%s234 + $0x48] sm:$0xff]
        %v473 = vld [vmem:[%s234 + $0x50] sm:$0xff]
        %v474 = vld [vmem:[%s234 + $0x58] sm:$0xff]
        %v475 = vld [vmem:[%s234 + $0x60] sm:$0xff]
        %v476 = vld [vmem:[%s234 + $0x68] sm:$0xff]
        %v477 = vld [vmem:[%s234 + $0x70] sm:$0xff]
        %v478 = vld [vmem:[%s234 + $0x78] sm:$0xff]
        %v479 = vld [vmem:[%s234 + $0x80] sm:$0xff]
        %v480 = vld [vmem:[%s234 + $0x88] sm:$0xff]
        %v481 = vld [vmem:[%s234 + $0x90] sm:$0xff]
        %v482 = vld [vmem:[%s234 + $0x98] sm:$0xff]
        %v483 = vld [vmem:[%s234 + $0xa0] sm:$0xff]
        %v484 = vld [vmem:[%s234 + $0xa8] sm:$0xff]
        %v485 = vld [vmem:[%s234 + $0xb0] sm:$0xff]
        %v486 = vld [vmem:[%s234 + $0xb8] sm:$0xff]
        %v487 = vld [vmem:[%s234 + $0xc0] sm:$0xff]
        %v488 = vld [vmem:[%s234 + $0xc8] sm:$0xff]
        %v489 = vld [vmem:[%s234 + $0xd0] sm:$0xff]
        %v490 = vld [vmem:[%s234 + $0xd8] sm:$0xff]
        %v491 = vld [vmem:[%s234 + $0xe0] sm:$0xff]
        %v492 = vld [vmem:[%s234 + $0xe8] sm:$0xff]
        %v493 = vld [vmem:[%s234 + $0xf0] sm:$0xff]
        %v494 = vld [vmem:[%s234 + $0xf8] sm:$0xff]
        %495 = vst [vmem:[%s266 + $0x18] sm:$0xff] %v463
        %496 = vst [vmem:[%s266 + $0x38] sm:$0xff] %v464
        %497 = vst [vmem:[%s266 + $0x58] sm:$0xff] %v465
        %498 = vst [vmem:[%s266 + $0x78] sm:$0xff] %v466
        %499 = vst [vmem:[%s266 + $0x98] sm:$0xff] %v467
        %500 = vst [vmem:[%s266 + $0xb8] sm:$0xff] %v468
        %501 = vst [vmem:[%s266 + $0xd8] sm:$0xff] %v469
        %502 = vst [vmem:[%s266 + $0xf8] sm:$0xff] %v470
        %503 = vst [vmem:[%s266 + $0x118] sm:$0xff] %v471
        %504 = vst [vmem:[%s266 + $0x138] sm:$0xff] %v472
        %505 = vst [vmem:[%s266 + $0x158] sm:$0xff] %v473
        %506 = vst [vmem:[%s266 + $0x178] sm:$0xff] %v474
        %507 = vst [vmem:[%s266 + $0x198] sm:$0xff] %v475
        %508 = vst [vmem:[%s266 + $0x1b8] sm:$0xff] %v476
        %509 = vst [vmem:[%s266 + $0x1d8] sm:$0xff] %v477
        %510 = vst [vmem:[%s266 + $0x1f8] sm:$0xff] %v478
        %511 = vst [vmem:[%s266 + $0x218] sm:$0xff] %v479
        %512 = vst [vmem:[%s266 + $0x238] sm:$0xff] %v480
        %513 = vst [vmem:[%s266 + $0x258] sm:$0xff] %v481
        %514 = vst [vmem:[%s266 + $0x278] sm:$0xff] %v482
        %515 = vst [vmem:[%s266 + $0x298] sm:$0xff] %v483
        %516 = vst [vmem:[%s266 + $0x2b8] sm:$0xff] %v484
        %517 = vst [vmem:[%s266 + $0x2d8] sm:$0xff] %v485
        %518 = vst [vmem:[%s266 + $0x2f8] sm:$0xff] %v486
        %519 = vst [vmem:[%s266 + $0x318] sm:$0xff] %v487
        %520 = vst [vmem:[%s266 + $0x338] sm:$0xff] %v488
        %521 = vst [vmem:[%s266 + $0x358] sm:$0xff] %v489
        %522 = vst [vmem:[%s266 + $0x378] sm:$0xff] %v490
        %523 = vst [vmem:[%s266 + $0x398] sm:$0xff] %v491
        %524 = vst [vmem:[%s266 + $0x3b8] sm:$0xff] %v492
        %525 = vst [vmem:[%s266 + $0x3d8] sm:$0xff] %v493
        %526 = vst [vmem:[%s266 + $0x3f8] sm:$0xff] %v494
        %s527 = sand.u32 %s109, 1
        %s528 = scalar_lea.sflag [#allocation4], %s527
        %s529 = sand.u32 %s109, 1
        %s530 = smul.addr %s529, 1024
        %s531 = scalar_lea.vmem [#allocation8], %s530
        // Predicated region
        $region45: #{tpu_custom_call.1} parent=31 // pred_check
          %p532 = pneg %p119
        $region46: #{tpu_custom_call.1} parent=31 // pred_check_branch
          %534 = sbr.rel (%p532) target = $region48
        $region47: #{tpu_custom_call.1} parent=31 // pred_region
          %s535 = smul.u32 32, %s23
          %s537 = ssub.s32 16384, 16384
          %538 = vsyncadd %s528, %s537
          %s539 = smul.addr %s535, 4
          %s540 = smul.addr %s539, 128
          %s541 = scalar_lea.hbm %s3, %s540
          %s542 = sshll.u32 %s531, 4
          %s543 = int_to_ptr.vmem [resolvable:$true] %s542
          %548 = dma.vmem_to_hbm [thread:$0]  %s543, 16384, %s541, %s528, 512, 512, 32
        $region48: #{tpu_custom_call.1} parent=31 // pred_fallthru
          _
      $region32: #{tpu_custom_call.1} parent=5 // pred_fallthru
        _
      %p549 = scmp.le.s32.totalorder 2, %s18
      // Predicated region
      $region49: #{tpu_custom_call.1} parent=5 // pred_check
        %p550 = pneg %p549
      $region50: #{tpu_custom_call.1} parent=5 // pred_check_branch
        %552 = sbr.rel (%p550) target = $region52
      $region51: #{tpu_custom_call.1} parent=5 // pred_region
        %s553 = ssub.s32 %s18, 2
        // Predicated region
        $region53: #{tpu_custom_call.1} parent=51 // pred_check
          %p554 = pneg %p125
        $region54: #{tpu_custom_call.1} parent=51 // pred_check_branch
          %556 = sbr.rel (%p554) target = $region56
        $region55: #{tpu_custom_call.1} parent=51 // pred_region
          %s557 = sand.u32 %s110, 1
          %s558 = scalar_lea.sflag [#allocation4], %s557
          %s559 = sand.u32 %s110, 1
          %s560 = smul.addr %s559, 1024
          %s561 = scalar_lea.vmem [#allocation8], %s560
          %562 = dma.done %s558, 16384
        $region56: #{tpu_custom_call.1} parent=51 // pred_fallthru
          _
      $region52: #{tpu_custom_call.1} parent=5 // pred_fallthru
        _
    $region6: #{tpu_custom_call.1} parent=1 // loop_footer
      %s22 = sadd.s32 1, %s18
    $region7: #{tpu_custom_call.1} parent=1 // loop_footer_branch
      %17 = sbr.rel target = $region3
    $region8: #{tpu_custom_call.1} parent=1 // loop_exit
      _
    %563 = vsyncpa [#allocation3], 1
    %s564 = scalar_lea.sflag [#allocation3], 1
    %565 = vsyncpa %s564, 1
    %566 = vsyncpa [#allocation6], 1
    %s567 = scalar_lea.sflag [#allocation6], 1
    %568 = vsyncpa %s567, 1
    %569 = vsyncpa [#allocation4], 1
    %s570 = scalar_lea.sflag [#allocation4], 1
    %571 = vsyncpa %s570, 1

</llo_original>
